<compile_context>
chip_gen: v7x
topology: tpu7x:2x2x1
jax: 0.10.0
libtpu: 0.0.40
codegen_flags: <defaults>
</compile_context>

<pallas_src>
import math
from functools import partial

import jax
import jax.numpy as jnp
from jax.experimental import pallas as pl
from jax.experimental.pallas import tpu as pltpu


def _round_up(n: int, m: int) -> int:
    return ((n + m - 1) // m) * m


def dnn_kernel(x_ref, w1_ref, b1_ref, wh_ref, bh_ref, out_ref, *, input_dims: int):
    """All tensors transposed: batch on the lane (last) axis.

    x_ref  : (D, TB)        w1_ref : (H, D)      b1_ref : (H, 1)
    wh_ref : (D+T, H)       bh_ref : (D+T, 1)    T = D*(D+1)/2
                            rows: [mu (D) | ls-diag (D) | ls-offdiag (T-D)]
    out_ref: (1, TB)
    """
    D = input_dims
    T = D * (D + 1) // 2

    xT = x_ref[...].astype(jnp.float32)                                   # (D, TB)

    # shared_l1 + ReLU       y1^T = W1 @ x^T + b1
    y1 = jnp.dot(w1_ref[...], xT, preferred_element_type=jnp.float32) + b1_ref[...]
    y1 = jnp.maximum(y1, 0.0)                                             # (H, TB)

    # Fused mu / log_sigma head: a single MXU issue for both heads.
    head = jnp.dot(wh_ref[...], y1, preferred_element_type=jnp.float32) + bh_ref[...]

    mu = jnp.maximum(head[0:D, :], 0.0)                                   # (D, TB)
    sig_diag = jax.nn.sigmoid(head[D:2 * D, :])                           # (D, TB)  = log(L_kk)
    inv_diag = jnp.exp(-sig_diag)                                         # (D, TB)  = 1 / L_kk
    if T > D:
        # L_kj (k > j) in strict-lower row-major order: index k*(k-1)//2 + j.
        off_fac = jnp.exp(jax.nn.sigmoid(head[2 * D:D + T, :]))           # (T-D, TB)
    log_det = jnp.sum(sig_diag, axis=0, keepdims=True)                    # (1, TB)

    diff = xT - mu                                                        # (D, TB)

    # Forward substitution  L z = diff  (D is tiny -> fully unrolled).
    z_rows = []
    for k in range(D):
        s = diff[k:k + 1, :]
        for j in range(k):
            m = k * (k - 1) // 2 + j
            s = s - off_fac[m:m + 1, :] * z_rows[j]
        z_rows.append(s * inv_diag[k:k + 1, :])                           # s / L_kk
    z = jnp.concatenate(z_rows, axis=0)                                   # (D, TB)
    maha = jnp.sum(z * z, axis=0, keepdims=True)                          # (1, TB)

    const = 0.5 * D * math.log(2.0 * math.pi)
    out_ref[...] = (-0.5 * maha - log_det - const).astype(out_ref.dtype)  # (1, TB)


def dnn_forward(x, params, *, input_dims: int, block_batch: int = 16384,
                x_feature_major: bool = False):
    """x: (B, D) float32 (or (D, B) if x_feature_major). Returns (B,) log-probs.

    block_batch: batch-tile size on the lane axis.  8K-32K amortises the
    ~0.35us/grid-step pipeline overhead; total VMEM stays at a few MiB.
    """
    D = input_dims
    T = D * (D + 1) // 2
    w1, b1, wmu, bmu, wls, bls = params

    B = x.shape[1] if x_feature_major else x.shape[0]

    # Tile selection: big lane-dense tiles, but keep >=2 grid steps when the
    # batch allows it so v7x's two TensorCores both get work ("parallel" axis).
    TB = _round_up(min(block_batch, B), 128)
    Bp = _round_up(B, TB)
    if Bp // TB == 1 and Bp >= 256:
        TB = _round_up(Bp // 2, 128)
        Bp = _round_up(B, TB)

    # Fuse the two heads wrapper-side, rows ordered [mu | ls-diag | ls-offdiag].
    diag_idx = jnp.array([k * (k + 3) // 2 for k in range(D)], jnp.int32)
    off_idx = jnp.array([i for i in range(T)
                         if i not in {k * (k + 3) // 2 for k in range(D)}], jnp.int32)
    w_head = jnp.concatenate([wmu, wls[diag_idx], wls[off_idx]], axis=0)   # (D+T, H)
    b_head = jnp.concatenate([bmu, bls[diag_idx], bls[off_idx]], axis=0)   # (D+T, 1)

    # Feature-major (D, Bp) layout for the kernel.  If the caller already has
    # feature-major data this is pad-only; otherwise it is one fused XLA
    # transpose+pad pass over x.
    # TODO(synk): have the upstream producer emit x feature-major to remove
    # this staging pass entirely.
    xT = (x if x_feature_major else x.T).astype(jnp.float32)
    if Bp != B:
        xT = jnp.pad(xT, ((0, 0), (0, Bp - B)))

    kernel = partial(dnn_kernel, input_dims=D)

    def _const_spec(arr):
        return pl.BlockSpec(arr.shape, lambda i: (0, 0))   # resident across batch grid

    out = pl.pallas_call(
        kernel,
        out_shape=jax.ShapeDtypeStruct((1, Bp), jnp.float32),
        grid_spec=pltpu.PrefetchScalarGridSpec(
            num_scalar_prefetch=0,
            grid=(Bp // TB,),
            in_specs=[
                pl.BlockSpec((D, TB), lambda i: (0, i)),    # x tile (batch on lanes)
                _const_spec(w1), _const_spec(b1),
                _const_spec(w_head), _const_spec(b_head),
            ],
            out_specs=pl.BlockSpec((1, TB), lambda i: (0, i)),  # lane-dense output
        ),
        compiler_params=pltpu.CompilerParams(
            dimension_semantics=("parallel",),
            vmem_limit_bytes=32 * 1024 * 1024,
        ),
    )(xT, w1, b1, w_head, b_head)

    return out[0, :B]


def init_params(key, input_dims: int, hidden_dims: int):
    """Deterministic synthetic parameters in nn.Linear layout: W (out, in), b (out, 1)."""
    T = input_dims * (input_dims + 1) // 2
    ks = jax.random.split(key, 6)
    s1 = 1.0 / math.sqrt(input_dims)
    s2 = 1.0 / math.sqrt(hidden_dims)
    w1 = jax.random.uniform(ks[0], (hidden_dims, input_dims), jnp.float32, -s1, s1)
    b1 = jax.random.uniform(ks[1], (hidden_dims, 1), jnp.float32, -s1, s1)
    wmu = jax.random.uniform(ks[2], (input_dims, hidden_dims), jnp.float32, -s2, s2)
    bmu = jax.random.uniform(ks[3], (input_dims, 1), jnp.float32, -s2, s2)
    wls = jax.random.uniform(ks[4], (T, hidden_dims), jnp.float32, -s2, s2)
    bls = jax.random.uniform(ks[5], (T, 1), jnp.float32, -s2, s2)
    return (w1, b1, wmu, bmu, wls, bls)


def _reference_forward(x, params, input_dims):
    """Pure-JAX reference (mirrors torch's MultivariateNormal.log_prob)."""
    w1, b1, wmu, bmu, wls, bls = params
    D = input_dims
    y1 = jax.nn.relu(x @ w1.T + b1[:, 0])
    mu = jax.nn.relu(y1 @ wmu.T + bmu[:, 0])
    sigma = jnp.exp(jax.nn.sigmoid(y1 @ wls.T + bls[:, 0]))
    rows, cols = jnp.tril_indices(D)
    L = jnp.zeros((x.shape[0], D, D), jnp.float32).at[:, rows, cols].set(sigma)
    diff = x - mu
    z = jax.scipy.linalg.solve_triangular(L, diff[..., None], lower=True)[..., 0]
    log_det = jnp.sum(jnp.log(jnp.diagonal(L, axis1=-2, axis2=-1)), axis=-1)
    return -0.5 * jnp.sum(z * z, axis=-1) - log_det - 0.5 * D * math.log(2.0 * math.pi)


if __name__ == "__main__":
    INPUT_DIMS = 4
    HIDDEN_DIMS = 32
    BATCH = 8

    key = jax.random.PRNGKey(0)
    kx, kp = jax.random.split(key)
    x = jax.random.normal(kx, (BATCH, INPUT_DIMS), jnp.float32)
    params = init_params(kp, INPUT_DIMS, HIDDEN_DIMS)

    logp = dnn_forward(x, params, input_dims=INPUT_DIMS)
    jax.block_until_ready(logp)

    ref = _reference_forward(x, params, INPUT_DIMS)
    assert logp.shape == (BATCH,)
    assert jnp.allclose(logp, ref, atol=1e-4, rtol=1e-4), (logp, ref)

    print("KERNEL_OK")
</pallas_src>

<mosaic_0001>
module attributes {stable_mosaic.version = 11 : i64} {
  func.func @dnn_kernel(%arg0: i32, %arg1: memref<4x128xf32, #tpu.memory_space<vmem>>, %arg2: memref<32x4xf32, #tpu.memory_space<vmem>>, %arg3: memref<32x1xf32, #tpu.memory_space<vmem>>, %arg4: memref<14x32xf32, #tpu.memory_space<vmem>>, %arg5: memref<14x1xf32, #tpu.memory_space<vmem>>, %arg6: memref<1x128xf32, #tpu.memory_space<vmem>>) attributes {dimension_semantics = [#tpu.dimension_semantics<parallel>], iteration_bounds = array<i64: 1>, scalar_prefetch = 0 : i64, scratch_operands = 0 : i64, tpu.core_type = #tpu.core_type<tc>, window_params = [{transform_indices = @transform_0, window_bounds = array<i64: 4, 128>}, {pipeline_mode = #tpu.pipeline_mode<synchronous>, transform_indices = @transform_1, window_bounds = array<i64: 32, 4>}, {pipeline_mode = #tpu.pipeline_mode<synchronous>, transform_indices = @transform_2, window_bounds = array<i64: 32, 1>}, {pipeline_mode = #tpu.pipeline_mode<synchronous>, transform_indices = @transform_3, window_bounds = array<i64: 14, 32>}, {pipeline_mode = #tpu.pipeline_mode<synchronous>, transform_indices = @transform_4, window_bounds = array<i64: 14, 1>}, {transform_indices = @transform_5, window_bounds = array<i64: 1, 128>}]} {
    %c0 = arith.constant 0 : index
    %c0_0 = arith.constant 0 : index
    %0 = vector.load %arg1[%c0, %c0_0] : memref<4x128xf32, #tpu.memory_space<vmem>>, vector<4x128xf32>
    %c0_1 = arith.constant 0 : index
    %c0_2 = arith.constant 0 : index
    %1 = vector.load %arg2[%c0_1, %c0_2] : memref<32x4xf32, #tpu.memory_space<vmem>>, vector<32x4xf32>
    %cst = arith.constant dense<0.000000e+00> : vector<32x128xf32>
    %2 = tpu.matmul %1, %0, %cst {dimension_numbers = #tpu.dot_dimension_numbers<[1], [0], [0], [1], [0, 0, 1, 1], [], []>} : vector<32x4xf32>, vector<4x128xf32>, vector<32x128xf32> -> vector<32x128xf32>
    %c0_3 = arith.constant 0 : index
    %c0_4 = arith.constant 0 : index
    %3 = vector.load %arg3[%c0_3, %c0_4] : memref<32x1xf32, #tpu.memory_space<vmem>>, vector<32x1xf32>
    %4 = vector.broadcast %3 : vector<32x1xf32> to vector<32x128xf32>
    %5 = arith.addf %2, %4 : vector<32x128xf32>
    %cst_5 = arith.constant 0.000000e+00 : f32
    %6 = vector.broadcast %cst_5 : f32 to vector<32x128xf32>
    %7 = arith.maximumf %5, %6 : vector<32x128xf32>
    %c0_6 = arith.constant 0 : index
    %c0_7 = arith.constant 0 : index
    %8 = vector.load %arg4[%c0_6, %c0_7] : memref<14x32xf32, #tpu.memory_space<vmem>>, vector<14x32xf32>
    %cst_8 = arith.constant dense<0.000000e+00> : vector<14x128xf32>
    %9 = tpu.matmul %8, %7, %cst_8 {dimension_numbers = #tpu.dot_dimension_numbers<[1], [0], [0], [1], [0, 0, 1, 1], [], []>} : vector<14x32xf32>, vector<32x128xf32>, vector<14x128xf32> -> vector<14x128xf32>
    %c0_9 = arith.constant 0 : index
    %c0_10 = arith.constant 0 : index
    %10 = vector.load %arg5[%c0_9, %c0_10] : memref<14x1xf32, #tpu.memory_space<vmem>>, vector<14x1xf32>
    %11 = vector.broadcast %10 : vector<14x1xf32> to vector<14x128xf32>
    %12 = arith.addf %9, %11 : vector<14x128xf32>
    %13 = vector.extract_strided_slice %12 {offsets = [0, 0], sizes = [4, 128], strides = [1, 1]} : vector<14x128xf32> to vector<4x128xf32>
    %cst_11 = arith.constant 0.000000e+00 : f32
    %14 = vector.broadcast %cst_11 : f32 to vector<4x128xf32>
    %15 = arith.maximumf %13, %14 : vector<4x128xf32>
    %16 = vector.extract_strided_slice %12 {offsets = [4, 0], sizes = [4, 128], strides = [1, 1]} : vector<14x128xf32> to vector<4x128xf32>
    %17 = arith.negf %16 : vector<4x128xf32>
    %18 = math.exp %17 : vector<4x128xf32>
    %cst_12 = arith.constant 1.000000e+00 : f32
    %19 = vector.broadcast %cst_12 : f32 to vector<4x128xf32>
    %20 = arith.addf %19, %18 : vector<4x128xf32>
    %21 = arith.divf %19, %20 : vector<4x128xf32>
    %cst_13 = arith.constant 0.000000e+00 : f32
    %22 = vector.broadcast %cst_13 : f32 to vector<4x128xf32>
    %23 = arith.subf %22, %21 : vector<4x128xf32>
    %24 = math.exp %23 : vector<4x128xf32>
    %25 = vector.extract_strided_slice %12 {offsets = [8, 0], sizes = [6, 128], strides = [1, 1]} : vector<14x128xf32> to vector<6x128xf32>
    %26 = arith.negf %25 : vector<6x128xf32>
    %27 = math.exp %26 : vector<6x128xf32>
    %cst_14 = arith.constant 1.000000e+00 : f32
    %28 = vector.broadcast %cst_14 : f32 to vector<6x128xf32>
    %29 = arith.addf %28, %27 : vector<6x128xf32>
    %30 = arith.divf %28, %29 : vector<6x128xf32>
    %31 = math.exp %30 : vector<6x128xf32>
    %cst_15 = arith.constant dense<0.000000e+00> : vector<128xf32>
    %32 = vector.multi_reduction <add>, %21, %cst_15 [0] : vector<4x128xf32> to vector<128xf32>
    %33 = vector.shape_cast %32 : vector<128xf32> to vector<1x128xf32>
    %34 = arith.subf %0, %15 : vector<4x128xf32>
    %35 = vector.extract_strided_slice %34 {offsets = [0, 0], sizes = [1, 128], strides = [1, 1]} : vector<4x128xf32> to vector<1x128xf32>
    %36 = vector.extract_strided_slice %24 {offsets = [0, 0], sizes = [1, 128], strides = [1, 1]} : vector<4x128xf32> to vector<1x128xf32>
    %37 = arith.mulf %35, %36 : vector<1x128xf32>
    %38 = vector.extract_strided_slice %34 {offsets = [1, 0], sizes = [1, 128], strides = [1, 1]} : vector<4x128xf32> to vector<1x128xf32>
    %39 = vector.extract_strided_slice %31 {offsets = [0, 0], sizes = [1, 128], strides = [1, 1]} : vector<6x128xf32> to vector<1x128xf32>
    %40 = arith.mulf %39, %37 : vector<1x128xf32>
    %41 = arith.subf %38, %40 : vector<1x128xf32>
    %42 = vector.extract_strided_slice %24 {offsets = [1, 0], sizes = [1, 128], strides = [1, 1]} : vector<4x128xf32> to vector<1x128xf32>
    %43 = arith.mulf %41, %42 : vector<1x128xf32>
    %44 = vector.extract_strided_slice %34 {offsets = [2, 0], sizes = [1, 128], strides = [1, 1]} : vector<4x128xf32> to vector<1x128xf32>
    %45 = vector.extract_strided_slice %31 {offsets = [1, 0], sizes = [1, 128], strides = [1, 1]} : vector<6x128xf32> to vector<1x128xf32>
    %46 = arith.mulf %45, %37 : vector<1x128xf32>
    %47 = arith.subf %44, %46 : vector<1x128xf32>
    %48 = vector.extract_strided_slice %31 {offsets = [2, 0], sizes = [1, 128], strides = [1, 1]} : vector<6x128xf32> to vector<1x128xf32>
    %49 = arith.mulf %48, %43 : vector<1x128xf32>
    %50 = arith.subf %47, %49 : vector<1x128xf32>
    %51 = vector.extract_strided_slice %24 {offsets = [2, 0], sizes = [1, 128], strides = [1, 1]} : vector<4x128xf32> to vector<1x128xf32>
    %52 = arith.mulf %50, %51 : vector<1x128xf32>
    %53 = vector.extract_strided_slice %34 {offsets = [3, 0], sizes = [1, 128], strides = [1, 1]} : vector<4x128xf32> to vector<1x128xf32>
    %54 = vector.extract_strided_slice %31 {offsets = [3, 0], sizes = [1, 128], strides = [1, 1]} : vector<6x128xf32> to vector<1x128xf32>
    %55 = arith.mulf %54, %37 : vector<1x128xf32>
    %56 = arith.subf %53, %55 : vector<1x128xf32>
    %57 = vector.extract_strided_slice %31 {offsets = [4, 0], sizes = [1, 128], strides = [1, 1]} : vector<6x128xf32> to vector<1x128xf32>
    %58 = arith.mulf %57, %43 : vector<1x128xf32>
    %59 = arith.subf %56, %58 : vector<1x128xf32>
    %60 = vector.extract_strided_slice %31 {offsets = [5, 0], sizes = [1, 128], strides = [1, 1]} : vector<6x128xf32> to vector<1x128xf32>
    %61 = arith.mulf %60, %52 : vector<1x128xf32>
    %62 = arith.subf %59, %61 : vector<1x128xf32>
    %63 = vector.extract_strided_slice %24 {offsets = [3, 0], sizes = [1, 128], strides = [1, 1]} : vector<4x128xf32> to vector<1x128xf32>
    %64 = arith.mulf %62, %63 : vector<1x128xf32>
    %65 = tpu.concatenate %37, %43, %52, %64 in 0 : vector<1x128xf32>, vector<1x128xf32>, vector<1x128xf32>, vector<1x128xf32> -> vector<4x128xf32>
    %66 = arith.mulf %65, %65 : vector<4x128xf32>
    %cst_16 = arith.constant dense<0.000000e+00> : vector<128xf32>
    %67 = vector.multi_reduction <add>, %66, %cst_16 [0] : vector<4x128xf32> to vector<128xf32>
    %68 = vector.shape_cast %67 : vector<128xf32> to vector<1x128xf32>
    %cst_17 = arith.constant -5.000000e-01 : f32
    %69 = vector.broadcast %cst_17 : f32 to vector<1x128xf32>
    %70 = arith.mulf %69, %68 : vector<1x128xf32>
    %71 = arith.subf %70, %33 : vector<1x128xf32>
    %cst_18 = arith.constant 3.67575407 : f32
    %72 = vector.broadcast %cst_18 : f32 to vector<1x128xf32>
    %73 = arith.subf %71, %72 : vector<1x128xf32>
    %c0_19 = arith.constant 0 : index
    %c0_20 = arith.constant 0 : index
    %74 = vector.load %arg6[%c0_19, %c0_20] : memref<1x128xf32, #tpu.memory_space<vmem>>, vector<1x128xf32>
    tpu.vector_store %arg6[%c0_19, %c0_20], %73 {strides = array<i32>} : memref<1x128xf32, #tpu.memory_space<vmem>>, vector<1x128xf32>,
    return
  }
  func.func @transform_0(%arg0: i32) -> (i32, i32) {
    %c0_i32 = arith.constant 0 : i32
    %c0_i32_0 = arith.constant 0 : i32
    return %c0_i32, %arg0 : i32, i32
  }
  func.func @transform_1(%arg0: i32) -> (i32, i32) {
    %c0_i32 = arith.constant 0 : i32
    %c0_i32_0 = arith.constant 0 : i32
    %c0_i32_1 = arith.constant 0 : i32
    return %c0_i32, %c0_i32_0 : i32, i32
  }
  func.func @transform_2(%arg0: i32) -> (i32, i32) {
    %c0_i32 = arith.constant 0 : i32
    %c0_i32_0 = arith.constant 0 : i32
    %c0_i32_1 = arith.constant 0 : i32
    return %c0_i32, %c0_i32_0 : i32, i32
  }
  func.func @transform_3(%arg0: i32) -> (i32, i32) {
    %c0_i32 = arith.constant 0 : i32
    %c0_i32_0 = arith.constant 0 : i32
    %c0_i32_1 = arith.constant 0 : i32
    return %c0_i32, %c0_i32_0 : i32, i32
  }
  func.func @transform_4(%arg0: i32) -> (i32, i32) {
    %c0_i32 = arith.constant 0 : i32
    %c0_i32_0 = arith.constant 0 : i32
    %c0_i32_1 = arith.constant 0 : i32
    return %c0_i32, %c0_i32_0 : i32, i32
  }
  func.func @transform_5(%arg0: i32) -> (i32, i32) {
    %c0_i32 = arith.constant 0 : i32
    %c0_i32_0 = arith.constant 0 : i32
    return %c0_i32, %arg0 : i32, i32
  }
}

</mosaic_0001>

<llo_original>
// kernel: tpu_custom_call.1
$region0: #{tpu_custom_call.1}
  #allocation0 [shape = 'u32[]', space=smem, size = 0x4, offset = 0x4, fixed_abs, tag = 'smem constant byte address 0x4 - core index']
  #allocation1 [shape = 'u32[144,128]{1,0:T(1,128)}', space=vmem, size = 0x12000, scoped, tag = 'internal scratch']
  %s0 = inlined_call_operand.vmem [shape: f32[4,128], index: 0, kind: input, shape index: {}]
  %s1 = inlined_call_operand.vmem [shape: f32[32,4], index: 1, kind: input, shape index: {}]
  %s2 = inlined_call_operand.vmem [shape: f32[32,1], index: 2, kind: input, shape index: {}]
  %s3 = inlined_call_operand.vmem [shape: f32[14,32], index: 3, kind: input, shape index: {}]
  %s4 = inlined_call_operand.vmem [shape: f32[14,1], index: 4, kind: input, shape index: {}]
  %s5 = inlined_call_operand.hbm [shape: f32[1,128], index: 5, kind: output, shape index: {}]
  %s6 = sld [smem:[#allocation0]]
  $region30: #{tpu_custom_call.1} parent=0
    _
  %s8 = ssub.s32 1, %s6
  %s9 = scalar_select 0, %s8, %s6
  $region1: #{tpu_custom_call.1} parent=0
    #allocation2 [shape = 'u8[512]{0}', space=vmem, size = 0x400, scoped, tag = 'output window, operand 0, single buffered']
    #allocation3 [shape = 's32[1]{0}', space=sflag, size = 0x4, scoped, tag = 'scoped memory for tpu_custom_call.1']
    %10 = vsyncpa [#allocation3], 0
    // Predicated region
    $region2: #{tpu_custom_call.1} parent=1 // pred_check
      _
    $region3: #{tpu_custom_call.1} parent=1 // pred_check_branch
      %12 = sbr.rel (0) target = $region5
    $region4: #{tpu_custom_call.1} parent=1 // pred_region
      _
    $region5: #{tpu_custom_call.1} parent=1 // pred_fallthru
      _
    // Predicated region
    $region6: #{tpu_custom_call.1} parent=1 // pred_check
      _
    $region7: #{tpu_custom_call.1} parent=1 // pred_check_branch
      %14 = sbr.rel (0) target = $region9
    $region8: #{tpu_custom_call.1} parent=1 // pred_region
      _
    $region9: #{tpu_custom_call.1} parent=1 // pred_fallthru
      _
    // Predicated region
    $region10: #{tpu_custom_call.1} parent=1 // pred_check
      _
    $region11: #{tpu_custom_call.1} parent=1 // pred_check_branch
      %16 = sbr.rel (0) target = $region13
    $region12: #{tpu_custom_call.1} parent=1 // pred_region
      _
    $region13: #{tpu_custom_call.1} parent=1 // pred_fallthru
      _
    // Predicated region
    $region14: #{tpu_custom_call.1} parent=1 // pred_check
      _
    $region15: #{tpu_custom_call.1} parent=1 // pred_check_branch
      %18 = sbr.rel (0) target = $region17
    $region16: #{tpu_custom_call.1} parent=1 // pred_region
      _
    $region17: #{tpu_custom_call.1} parent=1 // pred_fallthru
      _
    // Predicated region
    $region18: #{tpu_custom_call.1} parent=1 // pred_check
      _
    $region19: #{tpu_custom_call.1} parent=1 // pred_check_branch
      %20 = sbr.rel (0) target = $region21
    $region20: #{tpu_custom_call.1} parent=1 // pred_region
      _
    $region21: #{tpu_custom_call.1} parent=1 // pred_fallthru
      _
    %v21 = vld [vmem:[%s0] sm:$0xf]
    %v22 = vld [vmem:[%s1] sm:$0xff]
    %v23 = vld [vmem:[%s1 + $0x8] sm:$0xff]
    %v24 = vld [vmem:[%s1 + $0x10] sm:$0xff]
    %v25 = vld [vmem:[%s1 + $0x18] sm:$0xff]
    %v26 = vld [vmem:[%s2] sm:$0xff]
    %v27 = vld [vmem:[%s2 + $0x8] sm:$0xff]
    %v28 = vld [vmem:[%s2 + $0x10] sm:$0xff]
    %v29 = vld [vmem:[%s2 + $0x18] sm:$0xff]
    %31 = vset.pattern.permute.xlu0 0
    %32 = vperm.xlu0 %31, %v26
    %v33 = vpop.permute.xlu0 %32
    %36 = vset.pattern.permute.xlu0 0
    %37 = vperm.xlu0 %36, %v27
    %v38 = vpop.permute.xlu0 %37
    %41 = vset.pattern.permute.xlu0 0
    %42 = vperm.xlu0 %41, %v28
    %v43 = vpop.permute.xlu0 %42
    %46 = vset.pattern.permute.xlu0 0
    %47 = vperm.xlu0 %46, %v29
    %v48 = vpop.permute.xlu0 %47
    %vm50 = vcmask 31744
    %v52 = vsel %vm50, %v22, 0
    %v55 = vsel %vm50, %v23, 0
    %v58 = vsel %vm50, %v24, 0
    %v61 = vsel %vm50, %v25, 0
    %vm63 = vcmask 1043456
    %v65 = vsel %vm63, %v21, 0
    %67 = vmatprep.subr.mxu0 0.0
    %68 = vmatpush1.msra.mxu0 %v65
    %69 = vmatprep.subr.mxu0 0.0
    %70 = vmatpush1.msra.mxu0 0.0
    %71 = vmatprep.subr.mxu0 0.0
    %72 = vmatpush1.msra.mxu0 0.0
    %73 = vmatprep.subr.mxu0 0.0
    %74 = vmatpush1.msra.mxu0 0.0
    %75 = vmatprep.subr.mxu0 0.0
    %76 = vmatpush1.msra.mxu0 0.0
    %77 = vmatprep.subr.mxu0 0.0
    %78 = vmatpush1.msra.mxu0 0.0
    %79 = vmatprep.subr.mxu0 0.0
    %80 = vmatpush1.msra.mxu0 0.0
    %81 = vmatprep.subr.mxu0 0.0
    %82 = vmatpush1.msra.mxu0 0.0
    %83 = vmatprep.subr.mxu0 0.0
    %84 = vmatpush1.msra.mxu0 0.0
    %85 = vmatprep.subr.mxu0 0.0
    %86 = vmatpush1.msra.mxu0 0.0
    %87 = vmatprep.subr.mxu0 0.0
    %88 = vmatpush1.msra.mxu0 0.0
    %89 = vmatprep.subr.mxu0 0.0
    %90 = vmatpush1.msra.mxu0 0.0
    %91 = vmatprep.subr.mxu0 0.0
    %92 = vmatpush1.msra.mxu0 0.0
    %93 = vmatprep.subr.mxu0 0.0
    %94 = vmatpush1.msra.mxu0 0.0
    %95 = vmatprep.subr.mxu0 0.0
    %96 = vmatpush1.msra.mxu0 0.0
    %97 = vmatprep.subr.mxu0 0.0
    %98 = vmatpush1.msra.mxu0 0.0
    %99 = vmatprep.subr.mxu0 0.0
    %100 = vmatpush1.msra.mxu0 0.0
    %101 = vmatprep.subr.mxu0 0.0
    %102 = vmatpush1.msra.mxu0 0.0
    %103 = vmatprep.subr.mxu0 0.0
    %104 = vmatpush1.msra.mxu0 0.0
    %105 = vmatprep.subr.mxu0 0.0
    %106 = vmatpush1.msra.mxu0 0.0
    %107 = vmatprep.subr.mxu0 0.0
    %108 = vmatpush1.msra.mxu0 0.0
    %109 = vmatprep.subr.mxu0 0.0
    %110 = vmatpush1.msra.mxu0 0.0
    %111 = vmatprep.subr.mxu0 0.0
    %112 = vmatpush1.msra.mxu0 0.0
    %113 = vmatprep.subr.mxu0 0.0
    %114 = vmatpush1.msra.mxu0 0.0
    %115 = vmatprep.subr.mxu0 0.0
    %116 = vmatpush1.msra.mxu0 0.0
    %117 = vmatprep.subr.mxu0 0.0
    %118 = vmatpush1.msra.mxu0 0.0
    %119 = vmatprep.subr.mxu0 0.0
    %120 = vmatpush1.msra.mxu0 0.0
    %121 = vmatprep.subr.mxu0 0.0
    %122 = vmatpush1.msra.mxu0 0.0
    %123 = vmatprep.subr.mxu0 0.0
    %124 = vmatpush1.msra.mxu0 0.0
    %125 = vmatprep.subr.mxu0 0.0
    %126 = vmatpush1.msra.mxu0 0.0
    %127 = vmatprep.subr.mxu0 0.0
    %128 = vmatpush1.msra.mxu0 0.0
    %129 = vmatprep.subr.mxu0 0.0
    %130 = vmatpush1.msra.mxu0 0.0
    %131 = vmatprep.mubr.f32.mxu0 0.0
    %132 = vmatmul.mubr.f32.gmra.mrb[0].mxu0 %v52
    %v133 = vpop.f32.mrb[0].mxu0
    %v134 = vadd.f32 %v33, %v133
    %v135 = vpop.f32.mrb[0].mxu0
    %136 = vmatprep.mubr.f32.mxu0 0.0
    %137 = vmatmul.mubr.f32.gmra.mrb[0].mxu0 %v55
    %v138 = vpop.f32.mrb[0].mxu0
    %v139 = vadd.f32 %v38, %v138
    %v140 = vpop.f32.mrb[0].mxu0
    %141 = vmatprep.mubr.f32.mxu0 0.0
    %142 = vmatmul.mubr.f32.gmra.mrb[0].mxu0 %v58
    %v143 = vpop.f32.mrb[0].mxu0
    %v144 = vadd.f32 %v43, %v143
    %v145 = vpop.f32.mrb[0].mxu0
    %146 = vmatprep.mubr.f32.mxu0 0.0
    %147 = vmatmul.mubr.f32.gmra.mrb[0].mxu0 %v61
    %v148 = vpop.f32.mrb[0].mxu0
    %v149 = vadd.f32 %v48, %v148
    %v150 = vpop.f32.mrb[0].mxu0
    %151 = vdwg.mxu0
    %v152 = vmax.f32 %v134, 0.0
    %v153 = vmax.f32 %v139, 0.0
    %v154 = vmax.f32 %v144, 0.0
    %v155 = vmax.f32 %v149, 0.0
    %v156 = vld [vmem:[%s3] sm:$0xff]
    %v157 = vld [vmem:[%s3 + $0x8] sm:$0x3f]
    %v158 = vld [vmem:[%s4] sm:$0xff]
    %v159 = vld [vmem:[%s4 + $0x8] sm:$0x3f]
    %161 = vset.pattern.permute.xlu0 0
    %162 = vperm.xlu0 %161, %v158
    %v163 = vpop.permute.xlu0 %162
    %166 = vset.pattern.permute.xlu0 0
    %167 = vperm.xlu0 %166, %v159
    %v168 = vpop.permute.xlu0 %167
    %vm170 = vcmask 261120
    %v172 = vsel %vm170, %v156, 0
    %v175 = vsel %vm170, %v157, 0
    %177 = vmatprep.subr.mxu0 0.0
    %178 = vmatpush1.msra.mxu0 %v152
    %179 = vmatprep.subr.mxu0 0.0
    %180 = vmatpush1.msra.mxu0 %v153
    %181 = vmatprep.subr.mxu0 0.0
    %182 = vmatpush1.msra.mxu0 %v154
    %183 = vmatprep.subr.mxu0 0.0
    %184 = vmatpush1.msra.mxu0 %v155
    %185 = vmatprep.subr.mxu0 0.0
    %186 = vmatpush1.msra.mxu0 0.0
    %187 = vmatprep.subr.mxu0 0.0
    %188 = vmatpush1.msra.mxu0 0.0
    %189 = vmatprep.subr.mxu0 0.0
    %190 = vmatpush1.msra.mxu0 0.0
    %191 = vmatprep.subr.mxu0 0.0
    %192 = vmatpush1.msra.mxu0 0.0
    %193 = vmatprep.subr.mxu0 0.0
    %194 = vmatpush1.msra.mxu0 0.0
    %195 = vmatprep.subr.mxu0 0.0
    %196 = vmatpush1.msra.mxu0 0.0
    %197 = vmatprep.subr.mxu0 0.0
    %198 = vmatpush1.msra.mxu0 0.0
    %199 = vmatprep.subr.mxu0 0.0
    %200 = vmatpush1.msra.mxu0 0.0
    %201 = vmatprep.subr.mxu0 0.0
    %202 = vmatpush1.msra.mxu0 0.0
    %203 = vmatprep.subr.mxu0 0.0
    %204 = vmatpush1.msra.mxu0 0.0
    %205 = vmatprep.subr.mxu0 0.0
    %206 = vmatpush1.msra.mxu0 0.0
    %207 = vmatprep.subr.mxu0 0.0
    %208 = vmatpush1.msra.mxu0 0.0
    %209 = vmatprep.subr.mxu0 0.0
    %210 = vmatpush1.msra.mxu0 0.0
    %211 = vmatprep.subr.mxu0 0.0
    %212 = vmatpush1.msra.mxu0 0.0
    %213 = vmatprep.subr.mxu0 0.0
    %214 = vmatpush1.msra.mxu0 0.0
    %215 = vmatprep.subr.mxu0 0.0
    %216 = vmatpush1.msra.mxu0 0.0
    %217 = vmatprep.subr.mxu0 0.0
    %218 = vmatpush1.msra.mxu0 0.0
    %219 = vmatprep.subr.mxu0 0.0
    %220 = vmatpush1.msra.mxu0 0.0
    %221 = vmatprep.subr.mxu0 0.0
    %222 = vmatpush1.msra.mxu0 0.0
    %223 = vmatprep.subr.mxu0 0.0
    %224 = vmatpush1.msra.mxu0 0.0
    %225 = vmatprep.subr.mxu0 0.0
    %226 = vmatpush1.msra.mxu0 0.0
    %227 = vmatprep.subr.mxu0 0.0
    %228 = vmatpush1.msra.mxu0 0.0
    %229 = vmatprep.subr.mxu0 0.0
    %230 = vmatpush1.msra.mxu0 0.0
    %231 = vmatprep.subr.mxu0 0.0
    %232 = vmatpush1.msra.mxu0 0.0
    %233 = vmatprep.subr.mxu0 0.0
    %234 = vmatpush1.msra.mxu0 0.0
    %235 = vmatprep.subr.mxu0 0.0
    %236 = vmatpush1.msra.mxu0 0.0
    %237 = vmatprep.subr.mxu0 0.0
    %238 = vmatpush1.msra.mxu0 0.0
    %239 = vmatprep.subr.mxu0 0.0
    %240 = vmatpush1.msra.mxu0 0.0
    %241 = vmatprep.mubr.f32.mxu0 0.0
    %242 = vmatmul.mubr.f32.gmra.mrb[0].mxu0 %v172
    %v243 = vpop.f32.mrb[0].mxu0
    %v244 = vadd.f32 %v163, %v243
    %v245 = vpop.f32.mrb[0].mxu0
    %246 = vmatprep.mubr.f32.mxu0 0.0
    %247 = vmatmul.mubr.f32.gmra.mrb[0].mxu0 %v175
    %v248 = vpop.f32.mrb[0].mxu0
    %v249 = vadd.f32 %v168, %v248
    %v250 = vpop.f32.mrb[0].mxu0
    %251 = vdwg.mxu0
    %v252 = vmax.f32 %v244, 0.0
    %v253 = vxor.u32 %v244, 2147483648
    %v254 = vmul.f32 %v253, 1.442695
    %v255 = vpow.pop %v254
    %v256 = vadd.f32 %v255, 1.0
    %v257 = vrcp.pop %v256
    %v258 = vmul.f32 1.0, %v257
    %v259 = vsub.f32 0.0, %v258
    %v260 = vmul.f32 %v259, 1.442695
    %v261 = vpow.pop %v260
    %v262 = vxor.u32 %v249, 2147483648
    %v263 = vmul.f32 %v262, 1.442695
    %v264 = vpow.pop %v263
    %v265 = vadd.f32 %v264, 1.0
    %v266 = vrcp.pop %v265
    %v267 = vmul.f32 1.0, %v266
    %v268 = vmul.f32 %v267, 1.442695
    %v269 = vpow.pop %v268
    %v271 = vrot.slane %v258, 4
    %v273 = vsel %vm63, %v271, 0.0
    %v274 = vrot.slane %v273, 4
    %v275 = vadd.f32 %v273, %v274
    %v276 = vrot.slane %v275, 2
    %v277 = vadd.f32 %v275, %v276
    %v278 = vrot.slane %v277, 1
    %v279 = vadd.f32 %v277, %v278
    %v280 = vsub.f32 %v21, %v252
    %v282 = vrot.slane %v261, 4
    %v284 = vmul.f32 %v280, %v282
    %v285 = vmul.f32 %v269, %v284
    %v287 = vrot.slane %v285, 7
    %v289 = vsub.f32 %v280, %v287
    %v290 = vmul.f32 %v289, %v282
    %v292 = vrot.slane %v284, 7
    %v294 = vmul.f32 %v269, %v292
    %v296 = vrot.slane %v294, 7
    %v298 = vsub.f32 %v280, %v296
    %v300 = vrot.slane %v290, 7
    %v302 = vmul.f32 %v269, %v300
    %v303 = vsub.f32 %v298, %v302
    %v304 = vmul.f32 %v303, %v282
    %v305 = vrot.slane %v284, 5
    %v307 = vmul.f32 %v269, %v305
    %v308 = vsub.f32 %v280, %v307
    %v309 = vrot.slane %v290, 5
    %v311 = vmul.f32 %v269, %v309
    %v313 = vrot.slane %v311, 1
    %v315 = vsub.f32 %v308, %v313
    %v317 = vrot.slane %v304, 5
    %v319 = vmul.f32 %v269, %v317
    %v321 = vrot.slane %v319, 2
    %v323 = vsub.f32 %v315, %v321
    %v324 = vmul.f32 %v323, %v282
    %vm325 = vcmask 1040384
    %v326 = vsel %vm325, %v284, %v290
    %vm327 = vcmask 1041408
    %v328 = vsel %vm327, %v326, %v304
    %vm329 = vcmask 1042432
    %v330 = vsel %vm329, %v328, %v324
    %v331 = vmul.f32 %v330, %v330
    %v332 = vsel %vm63, %v331, 0.0
    %v333 = vrot.slane %v332, 4
    %v334 = vadd.f32 %v332, %v333
    %v335 = vrot.slane %v334, 2
    %v336 = vadd.f32 %v334, %v335
    %v337 = vrot.slane %v336, 1
    %v338 = vadd.f32 %v336, %v337
    %v339 = vmul.f32 %v338, -0.5
    %v340 = vsub.f32 %v339, %v279
    %v341 = vsub.f32 %v340, 3.675754
    %342 = vst [vmem:[#allocation2] sm:$0x1] %v341
    // Predicated region
    $region22: #{tpu_custom_call.1} parent=1 // pred_check
      _
    $region23: #{tpu_custom_call.1} parent=1 // pred_check_branch
      %344 = sbr.rel (0) target = $region25
    $region24: #{tpu_custom_call.1} parent=1 // pred_region
      %s346 = ssub.s32 16, 16
      %347 = vsyncadd [#allocation3], %s346
      %s349 = sshll.u32 [#allocation2], 4
      %s350 = int_to_ptr.vmem [resolvable:$true] %s349
      %352 = dma.vmem_to_hbm [thread:$0]  %s350, 16, %s5, [#allocation3]
    $region25: #{tpu_custom_call.1} parent=1 // pred_fallthru
      _
    // Predicated region
    $region26: #{tpu_custom_call.1} parent=1 // pred_check
      _
    $region27: #{tpu_custom_call.1} parent=1 // pred_check_branch
      %354 = sbr.rel (0) target = $region29
    $region28: #{tpu_custom_call.1} parent=1 // pred_region
      %355 = dma.done [#allocation3], 16
    $region29: #{tpu_custom_call.1} parent=1 // pred_fallthru
      _
    %356 = vsyncpa [#allocation3], 1

</llo_original>
